<compile_context>
chip_gen: v7x
topology: tpu7x:2x2x1
jax: 0.10.0
libtpu: 0.0.40
codegen_flags: <defaults>
</compile_context>

<pallas_src>
import functools
import math

import jax
import jax.numpy as jnp
from jax import lax
from jax.experimental import pallas as pl
from jax.experimental.pallas import tpu as pltpu

_LN_EPS = 1e-12  # layer_norm_eps default of the PyTorch module


# ---------------------------------------------------------------------------
# Shared math
# ---------------------------------------------------------------------------
def _gelu(x, approximate=False):
    if approximate:
        # tanh-approx GELU lowers to the (otherwise idle) EUP instead of a long
        # erf polynomial on the VALU over the widest tensor in the kernel.
        return jax.nn.gelu(x, approximate=True)
    # PyTorch F.gelu default ('none') -> exact erf-based GELU.
    return 0.5 * x * (1.0 + lax.erf(x * (1.0 / math.sqrt(2.0))))


def _layer_norm(x, gamma, beta, eps=_LN_EPS):
    mean = jnp.mean(x, axis=-1, keepdims=True)
    xc = x - mean
    var = jnp.mean(xc * xc, axis=-1, keepdims=True)
    return xc * lax.rsqrt(var + eps) * gamma + beta


def _step_math(x_f32, w1, b1, ln1g, ln1b, w2, b2, ln2g, ln2b, wgn, *,
               compute_dtype, approx_gelu):
    """One fused reasoning step on a [rows, H] block. f32 in / f32 out."""
    h_dim = x_f32.shape[-1]
    x_c = x_f32.astype(compute_dtype)                          # MXU operand

    # Fused first layer: x @ [W_core | W_gate_x] in one MXU pass (b_gate folded in).
    a = jnp.dot(x_c, w1, preferred_element_type=jnp.float32) + b1
    i_dim = a.shape[-1] - h_dim
    inter = a[:, :i_dim]
    gate_x = a[:, i_dim:]                                      # x-half of gate logits

    # reasoning_core: Linear -> LayerNorm -> (Dropout = identity in eval) -> GELU
    inter = _gelu(_layer_norm(inter, ln1g, ln1b), approx_gelu)

    # TODO(synk): memory attention (memory_query/key/value/output) is skipped —
    # the module's memory buffers start empty, so that branch is a no-op here.

    # output_projection: Linear -> LayerNorm -> (Dropout = identity in eval)
    new = jnp.dot(inter.astype(compute_dtype), w2,
                  preferred_element_type=jnp.float32) + b2
    new = _layer_norm(new, ln2g, ln2b)

    # gating: sigmoid([x, new] @ W_gate + b_gate)
    gate = jax.nn.sigmoid(
        gate_x + jnp.dot(new.astype(compute_dtype), wgn,
                         preferred_element_type=jnp.float32))

    # gate * new + (1 - gate) * x  ==  x + gate * (new - x)
    return x_f32 + gate * (new - x_f32)


# ---------------------------------------------------------------------------
# Kernel 1: fully fused recurrence (state + weights resident for all steps).
# ---------------------------------------------------------------------------
def _fused_recurrence_kernel(
    x_ref,      # [N, H]      f32
    mask_ref,   # [N, 1]      f32 (ones if no attention mask)
    seg_ref,    # [Bp, N]     f32, row b has 1/S on that batch's rows (batch-mean matrix)
    w1_ref,     # [H, I+H]    [W_core | W_gate_x]  compute dtype
    b1_ref,     # [1, I+H]    [b_core | b_gate]    f32
    ln1g_ref, ln1b_ref,       # [1, I]
    w2_ref,     # [I, H]
    b2_ref, ln2g_ref, ln2b_ref,  # [1, H]
    wgn_ref,    # [H, H]      W_gate_new
    out_ref,    # [N, H]      f32
    steps_ref,  # [1, 1]      int32
    state_scr,  # VMEM [N, H] f32 : recurrent state, lives across steps
    flags_scr,  # SMEM (2,)   int32: [done, steps_taken]
    *, max_steps, min_steps, early_stopping, threshold, compute_dtype, approx_gelu):
    state_scr[...] = x_ref[...].astype(jnp.float32)
    flags_scr[0] = 0   # done flag (global early-stop == the PyTorch `break`)
    flags_scr[1] = 0   # steps taken

    def loop_body(step, carry):
        @pl.when(flags_scr[0] == 0)
        def _():
            x = state_scr[...]
            new = _step_math(x, w1_ref[...], b1_ref[...], ln1g_ref[...], ln1b_ref[...],
                             w2_ref[...], b2_ref[...], ln2g_ref[...], ln2b_ref[...],
                             wgn_ref[...], compute_dtype=compute_dtype,
                             approx_gelu=approx_gelu)
            new = new * mask_ref[...]
            state_scr[...] = new
            flags_scr[1] = flags_scr[1] + 1
            if early_stopping:
                d = new - x
                # per-batch mean over seq of sum over H:  seg [Bp,N] @ d^2 [N,H] -> [Bp,H]
                batch_sq = jnp.dot(seg_ref[...], d * d,
                                   preferred_element_type=jnp.float32)
                max_diff = jnp.max(jnp.sum(batch_sq, axis=-1, keepdims=True))
                hit = jnp.logical_and(step >= (min_steps - 1), max_diff < threshold)
                flags_scr[0] = jnp.where(hit, jnp.int32(1), flags_scr[0])
        return carry

    lax.fori_loop(0, max_steps, loop_body, 0)
    out_ref[...] = state_scr[...].astype(out_ref.dtype)
    steps_ref[...] = jnp.zeros((1, 1), jnp.int32) + flags_scr[1]


# ---------------------------------------------------------------------------
# Kernel 2: one row-tiled reasoning step (fallback for big N*H), with the mask
# and the convergence row-reduction fused into the epilogue.
# ---------------------------------------------------------------------------
def _tiled_step_kernel(
    x_ref,      # [tm, H] f32  -- pipelined
    mask_ref,   # [tm, 1] f32  -- pipelined
    w1_ref, b1_ref, ln1g_ref, ln1b_ref, w2_ref, b2_ref, ln2g_ref, ln2b_ref, wgn_ref,
    out_ref,    # [tm, H] f32  -- pipelined
    dsq_ref,    # [tm, 1] f32  per-row sum((new - x)^2)
    *, compute_dtype, approx_gelu):
    x = x_ref[...]
    new = _step_math(x, w1_ref[...], b1_ref[...], ln1g_ref[...], ln1b_ref[...],
                     w2_ref[...], b2_ref[...], ln2g_ref[...], ln2b_ref[...],
                     wgn_ref[...], compute_dtype=compute_dtype,
                     approx_gelu=approx_gelu)
    new = new * mask_ref[...]
    d = new - x
    dsq_ref[...] = jnp.sum(d * d, axis=-1, keepdims=True)
    out_ref[...] = new.astype(out_ref.dtype)


# ---------------------------------------------------------------------------
# Parameters (synthetic, deterministic; [in, out] layout so y = x @ W + b).
# ---------------------------------------------------------------------------
def init_params(key, hidden_size, intermediate_size=None, dtype=jnp.float32):
    H = hidden_size
    I = intermediate_size or 4 * H
    ks = jax.random.split(key, 10)
    lin = lambda k, fan_in, shape: jax.random.normal(k, shape, dtype) / math.sqrt(fan_in)
    # TODO(synk): memory_{key,value,query,output} and quality_predictor weights are
    # omitted: the memory buffers start empty and the quality score is discarded by
    # forward(), so neither affects the returned tensors.
    return {
        "w_core": lin(ks[0], H, (H, I)),
        "b_core": 0.01 * jax.random.normal(ks[1], (I,), dtype),
        "ln1_g": 1.0 + 0.05 * jax.random.normal(ks[2], (I,), dtype),
        "ln1_b": 0.02 * jax.random.normal(ks[3], (I,), dtype),
        "w_proj": lin(ks[4], I, (I, H)),
        "b_proj": 0.01 * jax.random.normal(ks[5], (H,), dtype),
        "ln2_g": 1.0 + 0.05 * jax.random.normal(ks[6], (H,), dtype),
        "ln2_b": 0.02 * jax.random.normal(ks[7], (H,), dtype),
        "w_gate": lin(ks[8], 2 * H, (2 * H, H)),   # rows 0:H act on x, H:2H on new
        "b_gate": 0.01 * jax.random.normal(ks[9], (H,), dtype),
    }


# ---------------------------------------------------------------------------
# Wrapper helpers
# ---------------------------------------------------------------------------
def _round_up(x, m):
    return ((x + m - 1) // m) * m


def _vmem_capacity_bytes():
    try:
        info = pltpu.get_tpu_info()
        cap = int(getattr(info, "vmem_capacity_bytes", 0) or 0)
        if cap > 0:
            return cap
    except Exception:
        pass
    return 64 << 20   # conservative default (v7x per-core VMEM)


def _pack_params(params, compute_dtype):
    """Kernel weight layout; W_core and the x-half of W_gate fused into one matmul."""
    H, I = params["w_core"].shape
    f32 = jnp.float32
    w1 = jnp.concatenate([params["w_core"], params["w_gate"][:H]], axis=1).astype(compute_dtype)
    b1 = jnp.concatenate([params["b_core"], params["b_gate"]]).reshape(1, I + H).astype(f32)
    ln1g = params["ln1_g"].reshape(1, I).astype(f32)
    ln1b = params["ln1_b"].reshape(1, I).astype(f32)
    w2 = params["w_proj"].astype(compute_dtype)
    b2 = params["b_proj"].reshape(1, H).astype(f32)
    ln2g = params["ln2_g"].reshape(1, H).astype(f32)
    ln2b = params["ln2_b"].reshape(1, H).astype(f32)
    wgn = params["w_gate"][H:].astype(compute_dtype)
    return (w1, b1, ln1g, ln1b, w2, b2, ln2g, ln2b, wgn)


def _choose_row_tile(n_rows):
    """Tile <= 256 dividing n_rows, preferring >= 4 grid steps (>= 2 per v7x core)."""
    if n_rows % 8 != 0:
        # TODO(synk): ragged row counts would need a masked tail tile.
        return n_rows
    for min_grid in (4, 2, 1):
        for t in (256, 128, 64, 32, 16, 8):
            if n_rows % t == 0 and n_rows // t >= min_grid:
                return t
    return n_rows


# ---------------------------------------------------------------------------
# Path 1: fully fused recurrence (single pallas_call).
# ---------------------------------------------------------------------------
def _fused_forward(state0, mask, packed, *, B, S, H, I, max_steps, min_steps,
                   early_stopping, threshold, compute_dtype, approx_gelu,
                   vmem_need, vmem_cap):
    N = B * S
    Bp = _round_up(B, 8)
    rows = jnp.arange(N)
    seg = jnp.zeros((Bp, N), jnp.float32).at[rows // S, rows].set(1.0 / S)

    kernel = functools.partial(
        _fused_recurrence_kernel, max_steps=max_steps, min_steps=min_steps,
        early_stopping=early_stopping, threshold=float(threshold),
        compute_dtype=compute_dtype, approx_gelu=approx_gelu)

    vmem = pl.BlockSpec(memory_space=pltpu.MemorySpace.VMEM)
    limit = int(min(vmem_cap, max(32 << 20, 2 * vmem_need)))

    out, steps = pl.pallas_call(
        kernel,
        out_shape=(jax.ShapeDtypeStruct((N, H), jnp.float32),
                   jax.ShapeDtypeStruct((1, 1), jnp.int32)),
        in_specs=[vmem] * (3 + len(packed)),
        out_specs=(vmem, vmem),
        scratch_shapes=[pltpu.VMEM((N, H), jnp.float32),
                        pltpu.SMEM((2,), jnp.int32)],
        compiler_params=pltpu.CompilerParams(vmem_limit_bytes=limit),
    )(state0, mask, seg, *packed)
    return out, steps[0, 0]


# ---------------------------------------------------------------------------
# Path 2: row-tiled per-step kernel driven by lax.while_loop (large problems).
# ---------------------------------------------------------------------------
def _tiled_forward(state0, mask, packed, *, B, S, H, I, max_steps, min_steps,
                   early_stopping, threshold, compute_dtype, approx_gelu,
                   row_tile, vmem_cap):
    N = B * S
    packed_bytes = sum(int(a.size) * a.dtype.itemsize for a in packed)
    tm = row_tile if row_tile is not None else _choose_row_tile(N)
    assert N % tm == 0, "batch*seq must be divisible by the row tile"

    def need(t):
        # resident weights + double-buffered f32 state tiles + f32 temp headroom
        return packed_bytes + 4 * t * H * 4 + 4 * t * 4 + 6 * t * (I + H) * 4

    while need(tm) > int(0.9 * vmem_cap) and tm > 8 and N % (tm // 2) == 0:
        tm //= 2
    if need(tm) > vmem_cap:
        # TODO(synk): K/N-tiled weight streaming with an f32 accumulator is required
        # when the resident weights alone exceed VMEM (H >~ 1.8K bf16 on v7x).
        raise ValueError("RecurrentReasoningBlock: weights + activations exceed VMEM; "
                         "a K-tiled weight-streaming variant is required for this size.")
    limit = int(min(vmem_cap, max(32 << 20, 2 * need(tm))))

    row_spec = pl.BlockSpec((tm, H), lambda i: (i, 0))
    col_spec = pl.BlockSpec((tm, 1), lambda i: (i, 0))
    resident = pl.BlockSpec(memory_space=pltpu.MemorySpace.VMEM)
    kernel = functools.partial(_tiled_step_kernel, compute_dtype=compute_dtype,
                               approx_gelu=approx_gelu)

    call = pl.pallas_call(
        kernel,
        out_shape=(jax.ShapeDtypeStruct((N, H), jnp.float32),
                   jax.ShapeDtypeStruct((N, 1), jnp.float32)),
        grid=(N // tm,),
        in_specs=[row_spec, col_spec] + [resident] * len(packed),
        out_specs=(row_spec, col_spec),
        compiler_params=pltpu.CompilerParams(
            dimension_semantics=("parallel",), vmem_limit_bytes=limit),
    )

    def cond(c):
        i, done, _, _ = c
        return jnp.logical_and(i < max_steps, jnp.logical_not(done))

    def body(c):
        i, done, state, steps = c
        new_state, rowsq = call(state, mask, *packed)
        steps = steps + 1
        if early_stopping:
            batch_diff = rowsq.reshape(B, S).mean(axis=-1)            # [B], tiny
            conv = jnp.max(batch_diff) < threshold
            done = jnp.logical_or(done, jnp.logical_and(i >= min_steps - 1, conv))
        return (i + 1, done, new_state, steps)

    carry0 = (jnp.asarray(0, jnp.int32), jnp.asarray(False), state0,
              jnp.asarray(0, jnp.int32))
    _, _, state, steps = lax.while_loop(cond, body, carry0)
    return state, steps


# ---------------------------------------------------------------------------
# Public forward
# ---------------------------------------------------------------------------
def recurrent_reasoning_forward(hidden_states, params, *, attention_mask=None,
                                reasoning_depth=None, max_reasoning_steps=5,
                                min_reasoning_steps=1, early_stopping=True,
                                convergence_threshold=0.01,
                                compute_dtype=jnp.bfloat16, approx_gelu=False,
                                force_tiled=False, row_tile=None):
    """Pallas implementation of RecurrentReasoningBlock.forward (eval mode).

    Returns (refined_states [B, S, H], steps_taken [B]); the module's scalar
    return value is int(steps_taken.max()).
    """
    B, S, H = hidden_states.shape
    I = params["w_core"].shape[1]
    N = B * S
    max_steps = int(reasoning_depth or max_reasoning_steps)
    min_steps = int(min_reasoning_steps)

    # Recur in f32 (matches PyTorch); bf16 is used only for MXU operands in-kernel.
    state0 = hidden_states.reshape(N, H).astype(jnp.float32)
    if attention_mask is None:
        mask = jnp.ones((N, 1), jnp.float32)
    else:
        mask = attention_mask.reshape(N, 1).astype(jnp.float32)

    # TODO(synk): H (and I = 4H) should ideally be padded to a multiple of 128 for
    # lane-dense MXU/VPU work; doing so needs a masked LayerNorm, so it is not done here.
    packed = _pack_params(params, compute_dtype)
    packed_bytes = sum(int(a.size) * a.dtype.itemsize for a in packed)
    cap = _vmem_capacity_bytes()

    fused_need = (packed_bytes + 3 * N * H * 4 + 6 * N * (I + H) * 4
                  + _round_up(B, 8) * N * 4 + N * 4)
    use_fused = (not force_tiled) and fused_need <= int(0.5 * cap)

    common = dict(B=B, S=S, H=H, I=I, max_steps=max_steps, min_steps=min_steps,
                  early_stopping=bool(early_stopping),
                  threshold=float(convergence_threshold),
                  compute_dtype=compute_dtype, approx_gelu=bool(approx_gelu))
    if use_fused:
        out, steps = _fused_forward(state0, mask, packed, vmem_need=fused_need,
                                    vmem_cap=cap, **common)
    else:
        out, steps = _tiled_forward(state0, mask, packed, row_tile=row_tile,
                                    vmem_cap=cap, **common)

    out = out.reshape(B, S, H).astype(hidden_states.dtype)
    steps_taken = jnp.broadcast_to(steps.astype(jnp.int32), (B,))
    return out, steps_taken


# ---------------------------------------------------------------------------
# Pure-JAX reference (mirrors the PyTorch loop with a real Python `break`).
# ---------------------------------------------------------------------------
def _reference_forward(hidden_states, params, *, attention_mask=None,
                       reasoning_depth=None, max_reasoning_steps=5,
                       min_reasoning_steps=1, early_stopping=True,
                       convergence_threshold=0.01, compute_dtype=jnp.bfloat16,
                       approx_gelu=False):
    B, S, H = hidden_states.shape
    N = B * S
    cd, f32 = compute_dtype, jnp.float32
    max_steps = int(reasoning_depth or max_reasoning_steps)

    w_core = params["w_core"].astype(cd)
    w_proj = params["w_proj"].astype(cd)
    wgx = params["w_gate"][:H].astype(cd)
    wgn = params["w_gate"][H:].astype(cd)
    b_core = params["b_core"].astype(f32)
    b_proj = params["b_proj"].astype(f32)
    b_gate = params["b_gate"].astype(f32)
    ln1g, ln1b = params["ln1_g"].astype(f32), params["ln1_b"].astype(f32)
    ln2g, ln2b = params["ln2_g"].astype(f32), params["ln2_b"].astype(f32)

    state = hidden_states.reshape(N, H).astype(f32)
    mask = (jnp.ones((N, 1), f32) if attention_mask is None
            else attention_mask.reshape(N, 1).astype(f32))

    steps = 0
    for step in range(max_steps):
        prev = state
        x_c = prev.astype(cd)
        h = jnp.dot(x_c, w_core, preferred_element_type=f32) + b_core
        h = _gelu(_layer_norm(h, ln1g, ln1b), approx_gelu)
        new = jnp.dot(h.astype(cd), w_proj, preferred_element_type=f32) + b_proj
        new = _layer_norm(new, ln2g, ln2b)
        gate = jax.nn.sigmoid(
            jnp.dot(x_c, wgx, preferred_element_type=f32) + b_gate
            + jnp.dot(new.astype(cd), wgn, preferred_element_type=f32))
        new = gate * new + (1.0 - gate) * prev
        new = new * mask
        state = new
        steps += 1
        if early_stopping and step >= min_reasoning_steps - 1:
            d = new - prev
            state_diff = jnp.sum(d * d, axis=-1).reshape(B, S).mean(axis=-1)
            if bool(jnp.all(state_diff < convergence_threshold)):
                break
    return state.reshape(B, S, H).astype(hidden_states.dtype), steps


if __name__ == "__main__":
    B, S, H = 2, 16, 32
    key = jax.random.PRNGKey(0)
    k_h, k_p = jax.random.split(key)

    hidden_states = jax.random.normal(k_h, (B, S, H), jnp.float32)
    params = init_params(k_p, H)
    attn_mask = jnp.ones((B, S), jnp.float32).at[1, -3:].set(0.0)

    configs = (
        dict(attention_mask=attn_mask, force_tiled=False),   # fused recurrence path
        dict(attention_mask=None,      force_tiled=False),   # fused, no mask
        dict(attention_mask=attn_mask, force_tiled=True),    # tiled fallback path
    )
    for cfg in configs:
        out, steps = recurrent_reasoning_forward(hidden_states, params, **cfg)
        out = jax.block_until_ready(out)
        steps = jax.block_until_ready(steps)
        steps_taken = int(steps.max())                        # module's scalar return

        ref_out, ref_steps = _reference_forward(hidden_states, params,
                                                attention_mask=cfg["attention_mask"])
        assert out.shape == (B, S, H)
        assert steps_taken == ref_steps, (steps_taken, ref_steps)
        err = float(jnp.max(jnp.abs(out.astype(jnp.float32) - ref_out.astype(jnp.float32))))
        assert err < 1e-2, err

    print("KERNEL_OK")
</pallas_src>

<mosaic_0001>
module attributes {stable_mosaic.version = 11 : i64} {
  func.func @_fused_recurrence_kernel(%arg0: memref<32x32xf32, #tpu.memory_space<vmem>>, %arg1: memref<32x1xf32, #tpu.memory_space<vmem>>, %arg2: memref<8x32xf32, #tpu.memory_space<vmem>>, %arg3: memref<32x160xbf16, #tpu.memory_space<vmem>>, %arg4: memref<1x160xf32, #tpu.memory_space<vmem>>, %arg5: memref<1x128xf32, #tpu.memory_space<vmem>>, %arg6: memref<1x128xf32, #tpu.memory_space<vmem>>, %arg7: memref<128x32xbf16, #tpu.memory_space<vmem>>, %arg8: memref<1x32xf32, #tpu.memory_space<vmem>>, %arg9: memref<1x32xf32, #tpu.memory_space<vmem>>, %arg10: memref<1x32xf32, #tpu.memory_space<vmem>>, %arg11: memref<32x32xbf16, #tpu.memory_space<vmem>>, %arg12: memref<32x32xf32, #tpu.memory_space<vmem>>, %arg13: memref<1x1xi32, #tpu.memory_space<vmem>>, %arg14: memref<32x32xf32, #tpu.memory_space<vmem>>, %arg15: memref<2xi32, #tpu.memory_space<smem>>) attributes {dimension_semantics = [], scalar_prefetch = 0 : i64, scratch_operands = 2 : i64, tpu.core_type = #tpu.core_type<tc>} {
    %c0 = arith.constant 0 : index
    %c0_0 = arith.constant 0 : index
    %0 = vector.load %arg0[%c0, %c0_0] : memref<32x32xf32, #tpu.memory_space<vmem>>, vector<32x32xf32>
    %c0_1 = arith.constant 0 : index
    %c0_2 = arith.constant 0 : index
    %1 = vector.load %arg14[%c0_1, %c0_2] : memref<32x32xf32, #tpu.memory_space<vmem>>, vector<32x32xf32>
    tpu.vector_store %arg14[%c0_1, %c0_2], %0 {strides = array<i32>} : memref<32x32xf32, #tpu.memory_space<vmem>>, vector<32x32xf32>,
    %c0_i32 = arith.constant 0 : i32
    %c0_3 = arith.constant 0 : index
    %2 = memref.load %arg15[%c0_3] : memref<2xi32, #tpu.memory_space<smem>>
    memref.store %c0_i32, %arg15[%c0_3] : memref<2xi32, #tpu.memory_space<smem>>
    %c0_i32_4 = arith.constant 0 : i32
    %c1 = arith.constant 1 : index
    %3 = memref.load %arg15[%c1] : memref<2xi32, #tpu.memory_space<smem>>
    memref.store %c0_i32_4, %arg15[%c1] : memref<2xi32, #tpu.memory_space<smem>>
    %c0_i32_5 = arith.constant 0 : i32
    %c5_i32 = arith.constant 5 : i32
    %4 = arith.addi %c0_i32_5, %c5_i32 : i32
    %c1_i32 = arith.constant 1 : i32
    scf.for %arg16 = %c0_i32_5 to %4 step %c1_i32  : i32 {
      %c0_15 = arith.constant 0 : index
      %12 = memref.load %arg15[%c0_15] : memref<2xi32, #tpu.memory_space<smem>>
      %c0_i32_16 = arith.constant 0 : i32
      %13 = arith.cmpi eq, %12, %c0_i32_16 : i32
      %14 = arith.extui %13 : i1 to i32
      %c0_i32_17 = arith.constant 0 : i32
      %15 = arith.cmpi ne, %14, %c0_i32_17 : i32
      scf.if %15 {
        %c0_18 = arith.constant 0 : index
        %c0_19 = arith.constant 0 : index
        %16 = vector.load %arg14[%c0_18, %c0_19] : memref<32x32xf32, #tpu.memory_space<vmem>>, vector<32x32xf32>
        %c0_20 = arith.constant 0 : index
        %c0_21 = arith.constant 0 : index
        %17 = vector.load %arg3[%c0_20, %c0_21] : memref<32x160xbf16, #tpu.memory_space<vmem>>, vector<32x160xbf16>
        %c0_22 = arith.constant 0 : index
        %c0_23 = arith.constant 0 : index
        %18 = vector.load %arg4[%c0_22, %c0_23] : memref<1x160xf32, #tpu.memory_space<vmem>>, vector<1x160xf32>
        %c0_24 = arith.constant 0 : index
        %c0_25 = arith.constant 0 : index
        %19 = vector.load %arg5[%c0_24, %c0_25] : memref<1x128xf32, #tpu.memory_space<vmem>>, vector<1x128xf32>
        %c0_26 = arith.constant 0 : index
        %c0_27 = arith.constant 0 : index
        %20 = vector.load %arg6[%c0_26, %c0_27] : memref<1x128xf32, #tpu.memory_space<vmem>>, vector<1x128xf32>
        %c0_28 = arith.constant 0 : index
        %c0_29 = arith.constant 0 : index
        %21 = vector.load %arg7[%c0_28, %c0_29] : memref<128x32xbf16, #tpu.memory_space<vmem>>, vector<128x32xbf16>
        %c0_30 = arith.constant 0 : index
        %c0_31 = arith.constant 0 : index
        %22 = vector.load %arg8[%c0_30, %c0_31] : memref<1x32xf32, #tpu.memory_space<vmem>>, vector<1x32xf32>
        %c0_32 = arith.constant 0 : index
        %c0_33 = arith.constant 0 : index
        %23 = vector.load %arg9[%c0_32, %c0_33] : memref<1x32xf32, #tpu.memory_space<vmem>>, vector<1x32xf32>
        %c0_34 = arith.constant 0 : index
        %c0_35 = arith.constant 0 : index
        %24 = vector.load %arg10[%c0_34, %c0_35] : memref<1x32xf32, #tpu.memory_space<vmem>>, vector<1x32xf32>
        %c0_36 = arith.constant 0 : index
        %c0_37 = arith.constant 0 : index
        %25 = vector.load %arg11[%c0_36, %c0_37] : memref<32x32xbf16, #tpu.memory_space<vmem>>, vector<32x32xbf16>
        %26 = arith.truncf %16 : vector<32x32xf32> to vector<32x32xbf16>
        %cst = arith.constant dense<0.000000e+00> : vector<32x160xf32>
        %27 = tpu.matmul %26, %17, %cst {dimension_numbers = #tpu.dot_dimension_numbers<[1], [0], [0], [1], [0, 0, 1, 1], [], []>} : vector<32x32xbf16>, vector<32x160xbf16>, vector<32x160xf32> -> vector<32x160xf32>
        %28 = vector.broadcast %18 : vector<1x160xf32> to vector<32x160xf32>
        %29 = arith.addf %27, %28 : vector<32x160xf32>
        %30 = vector.extract_strided_slice %29 {offsets = [0, 0], sizes = [32, 128], strides = [1, 1]} : vector<32x160xf32> to vector<32x128xf32>
        %31 = vector.extract_strided_slice %29 {offsets = [0, 128], sizes = [32, 32], strides = [1, 1]} : vector<32x160xf32> to vector<32x32xf32>
        %cst_38 = arith.constant dense<0.000000e+00> : vector<32xf32>
        %32 = vector.multi_reduction <add>, %30, %cst_38 [1] : vector<32x128xf32> to vector<32xf32>
        %33 = vector.shape_cast %32 : vector<32xf32> to vector<32x1xf32>
        %cst_39 = arith.constant 1.280000e+02 : f32
        %34 = vector.broadcast %cst_39 : f32 to vector<32x1xf32>
        %35 = arith.divf %33, %34 : vector<32x1xf32>
        %36 = vector.broadcast %35 : vector<32x1xf32> to vector<32x128xf32>
        %37 = arith.subf %30, %36 : vector<32x128xf32>
        %38 = arith.mulf %37, %37 : vector<32x128xf32>
        %cst_40 = arith.constant dense<0.000000e+00> : vector<32xf32>
        %39 = vector.multi_reduction <add>, %38, %cst_40 [1] : vector<32x128xf32> to vector<32xf32>
        %40 = vector.shape_cast %39 : vector<32xf32> to vector<32x1xf32>
        %cst_41 = arith.constant 1.280000e+02 : f32
        %41 = vector.broadcast %cst_41 : f32 to vector<32x1xf32>
        %42 = arith.divf %40, %41 : vector<32x1xf32>
        %cst_42 = arith.constant 9.99999996E-13 : f32
        %43 = vector.broadcast %cst_42 : f32 to vector<32x1xf32>
        %44 = arith.addf %42, %43 : vector<32x1xf32>
        %45 = math.rsqrt %44 : vector<32x1xf32>
        %46 = vector.broadcast %45 : vector<32x1xf32> to vector<32x128xf32>
        %47 = arith.mulf %37, %46 : vector<32x128xf32>
        %48 = vector.broadcast %19 : vector<1x128xf32> to vector<32x128xf32>
        %49 = arith.mulf %47, %48 : vector<32x128xf32>
        %50 = vector.broadcast %20 : vector<1x128xf32> to vector<32x128xf32>
        %51 = arith.addf %49, %50 : vector<32x128xf32>
        %cst_43 = arith.constant 5.000000e-01 : f32
        %52 = vector.broadcast %cst_43 : f32 to vector<32x128xf32>
        %53 = arith.mulf %52, %51 : vector<32x128xf32>
        %cst_44 = arith.constant 0.707106769 : f32
        %54 = vector.broadcast %cst_44 : f32 to vector<32x128xf32>
        %55 = arith.mulf %51, %54 : vector<32x128xf32>
        %56 = math.erf %55 : vector<32x128xf32>
        %cst_45 = arith.constant 1.000000e+00 : f32
        %57 = vector.broadcast %cst_45 : f32 to vector<32x128xf32>
        %58 = arith.addf %57, %56 : vector<32x128xf32>
        %59 = arith.mulf %53, %58 : vector<32x128xf32>
        %60 = arith.truncf %59 : vector<32x128xf32> to vector<32x128xbf16>
        %cst_46 = arith.constant dense<0.000000e+00> : vector<32x32xf32>
        %61 = tpu.matmul %60, %21, %cst_46 {dimension_numbers = #tpu.dot_dimension_numbers<[1], [0], [0], [1], [0, 0, 1, 1], [], []>} : vector<32x128xbf16>, vector<128x32xbf16>, vector<32x32xf32> -> vector<32x32xf32>
        %62 = vector.broadcast %22 : vector<1x32xf32> to vector<32x32xf32>
        %63 = arith.addf %61, %62 : vector<32x32xf32>
        %cst_47 = arith.constant dense<0.000000e+00> : vector<32xf32>
        %64 = vector.multi_reduction <add>, %63, %cst_47 [1] : vector<32x32xf32> to vector<32xf32>
        %65 = vector.shape_cast %64 : vector<32xf32> to vector<32x1xf32>
        %cst_48 = arith.constant 3.200000e+01 : f32
        %66 = vector.broadcast %cst_48 : f32 to vector<32x1xf32>
        %67 = arith.divf %65, %66 : vector<32x1xf32>
        %68 = vector.broadcast %67 : vector<32x1xf32> to vector<32x32xf32>
        %69 = arith.subf %63, %68 : vector<32x32xf32>
        %70 = arith.mulf %69, %69 : vector<32x32xf32>
        %cst_49 = arith.constant dense<0.000000e+00> : vector<32xf32>
        %71 = vector.multi_reduction <add>, %70, %cst_49 [1] : vector<32x32xf32> to vector<32xf32>
        %72 = vector.shape_cast %71 : vector<32xf32> to vector<32x1xf32>
        %cst_50 = arith.constant 3.200000e+01 : f32
        %73 = vector.broadcast %cst_50 : f32 to vector<32x1xf32>
        %74 = arith.divf %72, %73 : vector<32x1xf32>
        %cst_51 = arith.constant 9.99999996E-13 : f32
        %75 = vector.broadcast %cst_51 : f32 to vector<32x1xf32>
        %76 = arith.addf %74, %75 : vector<32x1xf32>
        %77 = math.rsqrt %76 : vector<32x1xf32>
        %78 = vector.broadcast %77 : vector<32x1xf32> to vector<32x32xf32>
        %79 = arith.mulf %69, %78 : vector<32x32xf32>
        %80 = vector.broadcast %23 : vector<1x32xf32> to vector<32x32xf32>
        %81 = arith.mulf %79, %80 : vector<32x32xf32>
        %82 = vector.broadcast %24 : vector<1x32xf32> to vector<32x32xf32>
        %83 = arith.addf %81, %82 : vector<32x32xf32>
        %84 = arith.truncf %83 : vector<32x32xf32> to vector<32x32xbf16>
        %cst_52 = arith.constant dense<0.000000e+00> : vector<32x32xf32>
        %85 = tpu.matmul %84, %25, %cst_52 {dimension_numbers = #tpu.dot_dimension_numbers<[1], [0], [0], [1], [0, 0, 1, 1], [], []>} : vector<32x32xbf16>, vector<32x32xbf16>, vector<32x32xf32> -> vector<32x32xf32>
        %86 = arith.addf %31, %85 : vector<32x32xf32>
        %87 = arith.negf %86 : vector<32x32xf32>
        %88 = math.exp %87 : vector<32x32xf32>
        %cst_53 = arith.constant 1.000000e+00 : f32
        %89 = vector.broadcast %cst_53 : f32 to vector<32x32xf32>
        %90 = arith.addf %89, %88 : vector<32x32xf32>
        %91 = arith.divf %89, %90 : vector<32x32xf32>
        %92 = arith.subf %83, %16 : vector<32x32xf32>
        %93 = arith.mulf %91, %92 : vector<32x32xf32>
        %94 = arith.addf %16, %93 : vector<32x32xf32>
        %c0_54 = arith.constant 0 : index
        %c0_55 = arith.constant 0 : index
        %95 = vector.load %arg1[%c0_54, %c0_55] : memref<32x1xf32, #tpu.memory_space<vmem>>, vector<32x1xf32>
        %96 = vector.broadcast %95 : vector<32x1xf32> to vector<32x32xf32>
        %97 = arith.mulf %94, %96 : vector<32x32xf32>
        %c0_56 = arith.constant 0 : index
        %c0_57 = arith.constant 0 : index
        %98 = vector.load %arg14[%c0_56, %c0_57] : memref<32x32xf32, #tpu.memory_space<vmem>>, vector<32x32xf32>
        tpu.vector_store %arg14[%c0_56, %c0_57], %97 {strides = array<i32>} : memref<32x32xf32, #tpu.memory_space<vmem>>, vector<32x32xf32>,
        %c1_58 = arith.constant 1 : index
        %99 = memref.load %arg15[%c1_58] : memref<2xi32, #tpu.memory_space<smem>>
        %c1_i32_59 = arith.constant 1 : i32
        %100 = arith.addi %99, %c1_i32_59 : i32
        %c1_60 = arith.constant 1 : index
        %101 = memref.load %arg15[%c1_60] : memref<2xi32, #tpu.memory_space<smem>>
        memref.store %100, %arg15[%c1_60] : memref<2xi32, #tpu.memory_space<smem>>
        %102 = arith.subf %97, %16 : vector<32x32xf32>
        %c0_61 = arith.constant 0 : index
        %c0_62 = arith.constant 0 : index
        %103 = vector.load %arg2[%c0_61, %c0_62] : memref<8x32xf32, #tpu.memory_space<vmem>>, vector<8x32xf32>
        %104 = arith.mulf %102, %102 : vector<32x32xf32>
        %cst_63 = arith.constant dense<0.000000e+00> : vector<8x32xf32>
        %105 = tpu.matmul %103, %104, %cst_63 {dimension_numbers = #tpu.dot_dimension_numbers<[1], [0], [0], [1], [0, 0, 1, 1], [], []>} : vector<8x32xf32>, vector<32x32xf32>, vector<8x32xf32> -> vector<8x32xf32>
        %cst_64 = arith.constant dense<0.000000e+00> : vector<8xf32>
        %106 = vector.multi_reduction <add>, %105, %cst_64 [1] : vector<8x32xf32> to vector<8xf32>
        %107 = vector.shape_cast %106 : vector<8xf32> to vector<8x1xf32>
        %108 = vector.shape_cast %107 : vector<8x1xf32> to vector<1x8x1xf32>
        %cst_65 = arith.constant dense<0xFF800000> : vector<1xf32>
        %109 = vector.multi_reduction <maximumf>, %108, %cst_65 [1, 2] : vector<1x8x1xf32> to vector<1xf32>
        %110 = vector.shape_cast %109 : vector<1xf32> to vector<1x1x1xf32>
        %111 = vector.extract %110[0, 0, 0] : f32 from vector<1x1x1xf32>
        %c0_i32_66 = arith.constant 0 : i32
        %112 = arith.cmpi sge, %arg16, %c0_i32_66 : i32
        %cst_67 = arith.constant 0.00999999977 : f32
        %113 = arith.cmpf olt, %111, %cst_67 : f32
        %114 = arith.andi %112, %113 : i1
        %c0_68 = arith.constant 0 : index
        %115 = memref.load %arg15[%c0_68] : memref<2xi32, #tpu.memory_space<smem>>
        %c1_i32_69 = arith.constant 1 : i32
        %116 = arith.select %114, %c1_i32_69, %115 : i32
        %c0_70 = arith.constant 0 : index
        %117 = memref.load %arg15[%c0_70] : memref<2xi32, #tpu.memory_space<smem>>
        memref.store %116, %arg15[%c0_70] : memref<2xi32, #tpu.memory_space<smem>>
      } else {
      }
    }
    %c5_i32_6 = arith.constant 5 : i32
    %c0_7 = arith.constant 0 : index
    %c0_8 = arith.constant 0 : index
    %5 = vector.load %arg14[%c0_7, %c0_8] : memref<32x32xf32, #tpu.memory_space<vmem>>, vector<32x32xf32>
    %c0_9 = arith.constant 0 : index
    %c0_10 = arith.constant 0 : index
    %6 = vector.load %arg12[%c0_9, %c0_10] : memref<32x32xf32, #tpu.memory_space<vmem>>, vector<32x32xf32>
    tpu.vector_store %arg12[%c0_9, %c0_10], %5 {strides = array<i32>} : memref<32x32xf32, #tpu.memory_space<vmem>>, vector<32x32xf32>,
    %c0_i32_11 = arith.constant 0 : i32
    %7 = vector.broadcast %c0_i32_11 : i32 to vector<1x1xi32>
    %c1_12 = arith.constant 1 : index
    %8 = memref.load %arg15[%c1_12] : memref<2xi32, #tpu.memory_space<smem>>
    %9 = vector.broadcast %8 : i32 to vector<1x1xi32>
    %10 = arith.addi %7, %9 : vector<1x1xi32>
    %c0_13 = arith.constant 0 : index
    %c0_14 = arith.constant 0 : index
    %11 = vector.load %arg13[%c0_13, %c0_14] : memref<1x1xi32, #tpu.memory_space<vmem>>, vector<1x1xi32>
    tpu.vector_store %arg13[%c0_13, %c0_14], %10 {strides = array<i32>} : memref<1x1xi32, #tpu.memory_space<vmem>>, vector<1x1xi32>,
    return
  }
}

</mosaic_0001>

<llo_original>
// kernel: tpu_custom_call.1
$region0: #{tpu_custom_call.1}
  #allocation0 [shape = 'u32[]', space=smem, size = 0x4, offset = 0x4, fixed_abs, tag = 'smem constant byte address 0x4 - core index']
  #allocation1 [shape = 'u32[144,128]{1,0:T(1,128)}', space=vmem, size = 0x12000, scoped, tag = 'internal scratch']
  #allocation2 [shape = 'f32[32,32]{1,0:T(8,128)}', space=vmem, size = 0x4000, scoped, tag = 'scratch operand']
  #allocation3 [shape = 's32[2]{0:T(128)}', space=smem, size = 0x200, scoped, tag = 'scratch operand']
  %s0 = inlined_call_operand.vmem [shape: f32[32,32], index: 0, kind: input, shape index: {}]
  %s1 = inlined_call_operand.vmem [shape: f32[32,1], index: 1, kind: input, shape index: {}]
  %s2 = inlined_call_operand.vmem [shape: f32[8,32], index: 2, kind: input, shape index: {}]
  %s3 = inlined_call_operand.vmem [shape: bf16[32,160], index: 3, kind: input, shape index: {}]
  %s4 = inlined_call_operand.vmem [shape: f32[1,160], index: 4, kind: input, shape index: {}]
  %s5 = inlined_call_operand.vmem [shape: f32[1,128], index: 5, kind: input, shape index: {}]
  %s6 = inlined_call_operand.vmem [shape: f32[1,128], index: 6, kind: input, shape index: {}]
  %s7 = inlined_call_operand.vmem [shape: bf16[128,32], index: 7, kind: input, shape index: {}]
  %s8 = inlined_call_operand.vmem [shape: f32[1,32], index: 8, kind: input, shape index: {}]
  %s9 = inlined_call_operand.vmem [shape: f32[1,32], index: 9, kind: input, shape index: {}]
  %s10 = inlined_call_operand.vmem [shape: f32[1,32], index: 10, kind: input, shape index: {}]
  %s11 = inlined_call_operand.vmem [shape: bf16[32,32], index: 11, kind: input, shape index: {}]
  %s12 = inlined_call_operand.hbm [shape: f32[32,32], index: 12, kind: output, shape index: {0}]
  %s13 = inlined_call_operand.hbm [shape: s32[1,1], index: 13, kind: output, shape index: {1}]
  %14 = xla_tuple %s12, %s13
  %s15 = sld [smem:[#allocation0]]
  $region77: #{tpu_custom_call.1} parent=0
    _
  %s17 = ssub.s32 1, %s15
  %s18 = scalar_select 0, %s17, %s15
  $region1: #{tpu_custom_call.1} parent=0
    #allocation4 [shape = 'u8[16384]{0}', space=vmem, size = 0x4000, scoped, tag = 'output window, operand 0, single buffered']
    #allocation5 [shape = 's32[1]{0}', space=sflag, size = 0x4, scoped, tag = 'scoped memory for tpu_custom_call.1']
    #allocation6 [shape = 'u8[512]{0}', space=vmem, size = 0x400, scoped, tag = 'output window, operand 1, single buffered']
    #allocation7 [shape = 's32[1]{0}', space=sflag, size = 0x4, scoped, tag = 'scoped memory for tpu_custom_call.1']
    %19 = vsyncpa [#allocation5], 0
    %20 = vsyncpa [#allocation7], 0
    // Predicated region
    $region2: #{tpu_custom_call.1} parent=1 // pred_check
      _
    $region3: #{tpu_custom_call.1} parent=1 // pred_check_branch
      %22 = sbr.rel (0) target = $region5
    $region4: #{tpu_custom_call.1} parent=1 // pred_region
      _
    $region5: #{tpu_custom_call.1} parent=1 // pred_fallthru
      _
    // Predicated region
    $region6: #{tpu_custom_call.1} parent=1 // pred_check
      _
    $region7: #{tpu_custom_call.1} parent=1 // pred_check_branch
      %24 = sbr.rel (0) target = $region9
    $region8: #{tpu_custom_call.1} parent=1 // pred_region
      _
    $region9: #{tpu_custom_call.1} parent=1 // pred_fallthru
      _
    // Predicated region
    $region10: #{tpu_custom_call.1} parent=1 // pred_check
      _
    $region11: #{tpu_custom_call.1} parent=1 // pred_check_branch
      %26 = sbr.rel (0) target = $region13
    $region12: #{tpu_custom_call.1} parent=1 // pred_region
      _
    $region13: #{tpu_custom_call.1} parent=1 // pred_fallthru
      _
    // Predicated region
    $region14: #{tpu_custom_call.1} parent=1 // pred_check
      _
    $region15: #{tpu_custom_call.1} parent=1 // pred_check_branch
      %28 = sbr.rel (0) target = $region17
    $region16: #{tpu_custom_call.1} parent=1 // pred_region
      _
    $region17: #{tpu_custom_call.1} parent=1 // pred_fallthru
      _
    // Predicated region
    $region18: #{tpu_custom_call.1} parent=1 // pred_check
      _
    $region19: #{tpu_custom_call.1} parent=1 // pred_check_branch
      %30 = sbr.rel (0) target = $region21
    $region20: #{tpu_custom_call.1} parent=1 // pred_region
      _
    $region21: #{tpu_custom_call.1} parent=1 // pred_fallthru
      _
    // Predicated region
    $region22: #{tpu_custom_call.1} parent=1 // pred_check
      _
    $region23: #{tpu_custom_call.1} parent=1 // pred_check_branch
      %32 = sbr.rel (0) target = $region25
    $region24: #{tpu_custom_call.1} parent=1 // pred_region
      _
    $region25: #{tpu_custom_call.1} parent=1 // pred_fallthru
      _
    // Predicated region
    $region26: #{tpu_custom_call.1} parent=1 // pred_check
      _
    $region27: #{tpu_custom_call.1} parent=1 // pred_check_branch
      %34 = sbr.rel (0) target = $region29
    $region28: #{tpu_custom_call.1} parent=1 // pred_region
      _
    $region29: #{tpu_custom_call.1} parent=1 // pred_fallthru
      _
    // Predicated region
    $region30: #{tpu_custom_call.1} parent=1 // pred_check
      _
    $region31: #{tpu_custom_call.1} parent=1 // pred_check_branch
      %36 = sbr.rel (0) target = $region33
    $region32: #{tpu_custom_call.1} parent=1 // pred_region
      _
    $region33: #{tpu_custom_call.1} parent=1 // pred_fallthru
      _
    // Predicated region
    $region34: #{tpu_custom_call.1} parent=1 // pred_check
      _
    $region35: #{tpu_custom_call.1} parent=1 // pred_check_branch
      %38 = sbr.rel (0) target = $region37
    $region36: #{tpu_custom_call.1} parent=1 // pred_region
      _
    $region37: #{tpu_custom_call.1} parent=1 // pred_fallthru
      _
    // Predicated region
    $region38: #{tpu_custom_call.1} parent=1 // pred_check
      _
    $region39: #{tpu_custom_call.1} parent=1 // pred_check_branch
      %40 = sbr.rel (0) target = $region41
    $region40: #{tpu_custom_call.1} parent=1 // pred_region
      _
    $region41: #{tpu_custom_call.1} parent=1 // pred_fallthru
      _
    // Predicated region
    $region42: #{tpu_custom_call.1} parent=1 // pred_check
      _
    $region43: #{tpu_custom_call.1} parent=1 // pred_check_branch
      %42 = sbr.rel (0) target = $region45
    $region44: #{tpu_custom_call.1} parent=1 // pred_region
      _
    $region45: #{tpu_custom_call.1} parent=1 // pred_fallthru
      _
    // Predicated region
    $region46: #{tpu_custom_call.1} parent=1 // pred_check
      _
    $region47: #{tpu_custom_call.1} parent=1 // pred_check_branch
      %44 = sbr.rel (0) target = $region49
    $region48: #{tpu_custom_call.1} parent=1 // pred_region
      _
    $region49: #{tpu_custom_call.1} parent=1 // pred_fallthru
      _
    %v46 = vld [vmem:[%s0] sm:$0xff]
    %v47 = vld [vmem:[%s0 + $0x8] sm:$0xff]
    %v48 = vld [vmem:[%s0 + $0x10] sm:$0xff]
    %v49 = vld [vmem:[%s0 + $0x18] sm:$0xff]
    %vm50 = vcmask 261120
    %51 = vst.msk [vmem:[#allocation2] sm:$0xff] %vm50, %v46
    %52 = vst.msk [vmem:[#allocation2 + $0x8] sm:$0xff] %vm50, %v47
    %53 = vst.msk [vmem:[#allocation2 + $0x10] sm:$0xff] %vm50, %v48
    %54 = vst.msk [vmem:[#allocation2 + $0x18] sm:$0xff] %vm50, %v49
    %s55 = scalar_lea.smem [#allocation3], 0
    %56 = sst [smem:[%s55]] 0
    %s57 = scalar_lea.smem [#allocation3], 1
    %58 = sst [smem:[%s57]] 0
    loop: start=0, step=1, limit=5
    $region50: #{tpu_custom_call.1} parent=1 // loop_pre_header
      _
    $region51: #{tpu_custom_call.1} parent=1 // loop_header
      %s60 = sphi 0, %s64
      %p61 = scmp.ge.s32.totalorder %s60, 5
    $region52: #{tpu_custom_call.1} parent=1 // loop_header_branch
      %63 = sbr.rel (%p61) target = $region56
    $region53: #{tpu_custom_call.1} parent=1 // loop_body
      %s65 = sld [smem:[#allocation3]]
      %p66 = scmp.eq.s32.totalorder %s65, 0
      // Predicated region
      $region57: #{tpu_custom_call.1} parent=53 // pred_check
        %p67 = pneg %p66
      $region58: #{tpu_custom_call.1} parent=53 // pred_check_branch
        %69 = sbr.rel (%p67) target = $region60
      $region59: #{tpu_custom_call.1} parent=53 // pred_region
        %v70 = vld [vmem:[#allocation2] sm:$0xff]
        %v71 = vld [vmem:[#allocation2 + $0x8] sm:$0xff]
        %v72 = vld [vmem:[#allocation2 + $0x10] sm:$0xff]
        %v73 = vld [vmem:[#allocation2 + $0x18] sm:$0xff]
        %v74 = vld [vmem:[%s3] sm:$0xff]
        %v75 = vld [vmem:[%s3 + $0x8] sm:$0xff]
        %v76 = vld [vmem:[%s3 + $0x10] sm:$0xff]
        %v77 = vld [vmem:[%s3 + $0x18] sm:$0xff]
        %v78 = vld [vmem:[%s4] sm:$0x3]
        %v79 = vld [vmem:[%s5] sm:$0x1]
        %v80 = vld [vmem:[%s6] sm:$0x1]
        %v81 = vld [vmem:[%s7] sm:$0xf]
        %v82 = vld [vmem:[%s7 + $0x4] sm:$0xf]
        %v83 = vld [vmem:[%s7 + $0x8] sm:$0xf]
        %v84 = vld [vmem:[%s7 + $0xc] sm:$0xf]
        %v85 = vld [vmem:[%s7 + $0x10] sm:$0xf]
        %v86 = vld [vmem:[%s7 + $0x14] sm:$0xf]
        %v87 = vld [vmem:[%s7 + $0x18] sm:$0xf]
        %v88 = vld [vmem:[%s7 + $0x1c] sm:$0xf]
        %v89 = vld [vmem:[%s7 + $0x20] sm:$0xf]
        %v90 = vld [vmem:[%s7 + $0x24] sm:$0xf]
        %v91 = vld [vmem:[%s7 + $0x28] sm:$0xf]
        %v92 = vld [vmem:[%s7 + $0x2c] sm:$0xf]
        %v93 = vld [vmem:[%s7 + $0x30] sm:$0xf]
        %v94 = vld [vmem:[%s7 + $0x34] sm:$0xf]
        %v95 = vld [vmem:[%s7 + $0x38] sm:$0xf]
        %v96 = vld [vmem:[%s7 + $0x3c] sm:$0xf]
        %v97 = vld [vmem:[%s8] sm:$0x1]
        %v98 = vld [vmem:[%s9] sm:$0x1]
        %v99 = vld [vmem:[%s10] sm:$0x1]
        %v100 = vld [vmem:[%s11] sm:$0xf]
        %v101 = vld [vmem:[%s11 + $0x4] sm:$0xf]
        %v102 = vld [vmem:[%s11 + $0x8] sm:$0xf]
        %v103 = vld [vmem:[%s11 + $0xc] sm:$0xf]
        %v104 = vpack.c.bf16 %v71, %v70
        %v105 = vpack.c.bf16 %v73, %v72
        %v107 = vlaneseq
        %v108 = vshrl.u32 %v107, 7
        %v109 = vsub.s32 0, %v108
        %v110 = vrot.slane %v78, %v109
        %v111 = vlaneseq
        %v112 = vshrl.u32 %v111, 7
        %v113 = vsub.s32 1, %v112
        %v114 = vrot.slane %v78, %v113
        %v121 = vunpack.c.l.b16 %v74
        %v122 = vunpack.c.h.b16 %v74
        %v123 = vunpack.c.l.b16 %v75
        %v124 = vunpack.c.h.b16 %v75
        %v125 = vunpack.c.l.b16 %v76
        %v126 = vunpack.c.h.b16 %v76
        %v127 = vunpack.c.l.b16 %v77
        %v128 = vunpack.c.h.b16 %v77
        %v129 = vpack.c.b16 %v123, %v121
        %v130 = vpack.c.b16 %v124, %v122
        %v131 = vpack.c.b16 %v127, %v125
        %v132 = vpack.c.b16 %v128, %v126
        %v138 = vsel %vm50, %v104, 0
        %v141 = vsel %vm50, %v105, 0
        %143 = vmatprep.subr.bf16.mxu0 %v130
        %144 = vmatpush1.bf16.msra.mxu0 %v129
        %145 = vmatprep.subr.bf16.mxu0 %v132
        %146 = vmatpush1.bf16.msra.mxu0 %v131
        %147 = vmatprep.subr.bf16.mxu0 0
        %148 = vmatpush1.bf16.msra.mxu0 0
        %149 = vmatprep.subr.bf16.mxu0 0
        %150 = vmatpush1.bf16.msra.mxu0 0
        %151 = vmatprep.subr.bf16.mxu0 0
        %152 = vmatpush1.bf16.msra.mxu0 0
        %153 = vmatprep.subr.bf16.mxu0 0
        %154 = vmatpush1.bf16.msra.mxu0 0
        %155 = vmatprep.subr.bf16.mxu0 0
        %156 = vmatpush1.bf16.msra.mxu0 0
        %157 = vmatprep.subr.bf16.mxu0 0
        %158 = vmatpush1.bf16.msra.mxu0 0
        %159 = vmatprep.subr.bf16.mxu0 0
        %160 = vmatpush1.bf16.msra.mxu0 0
        %161 = vmatprep.subr.bf16.mxu0 0
        %162 = vmatpush1.bf16.msra.mxu0 0
        %163 = vmatprep.subr.bf16.mxu0 0
        %164 = vmatpush1.bf16.msra.mxu0 0
        %165 = vmatprep.subr.bf16.mxu0 0
        %166 = vmatpush1.bf16.msra.mxu0 0
        %167 = vmatprep.subr.bf16.mxu0 0
        %168 = vmatpush1.bf16.msra.mxu0 0
        %169 = vmatprep.subr.bf16.mxu0 0
        %170 = vmatpush1.bf16.msra.mxu0 0
        %171 = vmatprep.subr.bf16.mxu0 0
        %172 = vmatpush1.bf16.msra.mxu0 0
        %173 = vmatprep.subr.bf16.mxu0 0
        %174 = vmatpush1.bf16.msra.mxu0 0
        %175 = vmatprep.mubr.bf16.mxu0 0
        %176 = vmatmul.mubr.bf16.gmra.mrb[0].mxu0 %v138
        %v177 = vpop.f32.mrb[0].mxu0
        %v178 = vadd.f32 %v110, %v177
        %v179 = vpop.f32.mrb[0].mxu0
        %v180 = vadd.f32 %v114, %v179
        %v181 = vpop.f32.mrb[0].mxu0
        %v182 = vadd.f32 %v110, %v181
        %v183 = vpop.f32.mrb[0].mxu0
        %v184 = vadd.f32 %v114, %v183
        %185 = vmatprep.mubr.bf16.mxu0 0
        %186 = vmatmul.mubr.bf16.gmra.mrb[0].mxu0 %v141
        %v187 = vpop.f32.mrb[0].mxu0
        %v188 = vadd.f32 %v110, %v187
        %v189 = vpop.f32.mrb[0].mxu0
        %v190 = vadd.f32 %v114, %v189
        %v191 = vpop.f32.mrb[0].mxu0
        %v192 = vadd.f32 %v110, %v191
        %v193 = vpop.f32.mrb[0].mxu0
        %v194 = vadd.f32 %v114, %v193
        %195 = vdwg.mxu0
        %196 = vadd.xlane.f32.xlu0 %v178
        %v197 = vpop.xlane.xlu0 %196
        %198 = vadd.xlane.f32.xlu0 %v182
        %v199 = vpop.xlane.xlu0 %198
        %200 = vadd.xlane.f32.xlu0 %v188
        %v201 = vpop.xlane.xlu0 %200
        %202 = vadd.xlane.f32.xlu0 %v192
        %v203 = vpop.xlane.xlu0 %202
        %v204 = vrcp.pop 128.0
        %v205 = vmul.f32 %v197, %v204
        %v206 = vmul.f32 %v199, %v204
        %v207 = vmul.f32 %v201, %v204
        %v208 = vmul.f32 %v203, %v204
        %v209 = vsub.f32 %v178, %v205
        %v210 = vsub.f32 %v182, %v206
        %v211 = vsub.f32 %v188, %v207
        %v212 = vsub.f32 %v192, %v208
        %v213 = vmul.f32 %v209, %v209
        %v214 = vmul.f32 %v210, %v210
        %v215 = vmul.f32 %v211, %v211
        %v216 = vmul.f32 %v212, %v212
        %217 = vadd.xlane.f32.xlu0 %v213
        %v218 = vpop.xlane.xlu0 %217
        %219 = vadd.xlane.f32.xlu0 %v214
        %v220 = vpop.xlane.xlu0 %219
        %221 = vadd.xlane.f32.xlu0 %v215
        %v222 = vpop.xlane.xlu0 %221
        %223 = vadd.xlane.f32.xlu0 %v216
        %v224 = vpop.xlane.xlu0 %223
        %v225 = vmul.f32 %v218, %v204
        %v226 = vmul.f32 %v220, %v204
        %v227 = vmul.f32 %v222, %v204
        %v228 = vmul.f32 %v224, %v204
        %v229 = vadd.f32 %v225, 1e-12
        %v230 = vadd.f32 %v226, 1e-12
        %v231 = vadd.f32 %v227, 1e-12
        %v232 = vadd.f32 %v228, 1e-12
        %v233 = vrsqrt.pop %v229
        %v234 = vrsqrt.pop %v230
        %v235 = vrsqrt.pop %v231
        %v236 = vrsqrt.pop %v232
        %v237 = vmul.f32 %v209, %v233
        %v238 = vmul.f32 %v210, %v234
        %v239 = vmul.f32 %v211, %v235
        %v240 = vmul.f32 %v212, %v236
        %v242 = vlaneseq
        %v243 = vshrl.u32 %v242, 7
        %v244 = vsub.s32 0, %v243
        %v245 = vrot.slane %v79, %v244
        %v247 = vmul.f32 %v237, %v245
        %v248 = vmul.f32 %v238, %v245
        %v249 = vmul.f32 %v239, %v245
        %v250 = vmul.f32 %v240, %v245
        %v252 = vlaneseq
        %v253 = vshrl.u32 %v252, 7
        %v254 = vsub.s32 0, %v253
        %v255 = vrot.slane %v80, %v254
        %v257 = vadd.f32 %v247, %v255
        %v258 = vadd.f32 %v248, %v255
        %v259 = vadd.f32 %v249, %v255
        %v260 = vadd.f32 %v250, %v255
        %v261 = vmul.f32 %v257, 0.5
        %v262 = vmul.f32 %v258, 0.5
        %v263 = vmul.f32 %v259, 0.5
        %v264 = vmul.f32 %v260, 0.5
        %v265 = vmul.f32 %v257, 0.70710677
        %v266 = vmul.f32 %v258, 0.70710677
        %v267 = vmul.f32 %v259, 0.70710677
        %v268 = vmul.f32 %v260, 0.70710677
        %v269 = verf.f32.pop %v265
        %v270 = verf.f32.pop %v266
        %v271 = verf.f32.pop %v267
        %v272 = verf.f32.pop %v268
        %v273 = vadd.f32 %v269, 1.0
        %v274 = vadd.f32 %v270, 1.0
        %v275 = vadd.f32 %v271, 1.0
        %v276 = vadd.f32 %v272, 1.0
        %v277 = vmul.f32 %v261, %v273
        %v278 = vmul.f32 %v262, %v274
        %v279 = vmul.f32 %v263, %v275
        %v280 = vmul.f32 %v264, %v276
        %v281 = vpack.c.bf16 %v278, %v277
        %v282 = vpack.c.bf16 %v280, %v279
        %v284 = vlaneseq
        %v285 = vshrl.u32 %v284, 7
        %v286 = vsub.s32 0, %v285
        %v287 = vrot.slane %v97, %v286
        %v305 = vunpack.c.l.b16 %v81
        %v306 = vunpack.c.l.b16 %v82
        %v307 = vunpack.c.l.b16 %v83
        %v308 = vunpack.c.l.b16 %v84
        %v309 = vunpack.c.l.b16 %v85
        %v310 = vunpack.c.l.b16 %v86
        %v311 = vunpack.c.l.b16 %v87
        %v312 = vunpack.c.l.b16 %v88
        %v313 = vunpack.c.l.b16 %v89
        %v314 = vunpack.c.l.b16 %v90
        %v315 = vunpack.c.l.b16 %v91
        %v316 = vunpack.c.l.b16 %v92
        %v317 = vunpack.c.l.b16 %v93
        %v318 = vunpack.c.l.b16 %v94
        %v319 = vunpack.c.l.b16 %v95
        %v320 = vunpack.c.l.b16 %v96
        %v321 = vpack.c.b16 %v306, %v305
        %v322 = vpack.c.b16 %v308, %v307
        %v323 = vpack.c.b16 %v310, %v309
        %v324 = vpack.c.b16 %v312, %v311
        %v325 = vpack.c.b16 %v314, %v313
        %v326 = vpack.c.b16 %v316, %v315
        %v327 = vpack.c.b16 %v318, %v317
        %v328 = vpack.c.b16 %v320, %v319
        %337 = vmatprep.subr.bf16.mxu0 0
        %338 = vmatpush1.bf16.msra.mxu0 %v321
        %339 = vmatprep.subr.bf16.mxu0 0
        %340 = vmatpush1.bf16.msra.mxu0 %v322
        %341 = vmatprep.subr.bf16.mxu0 0
        %342 = vmatpush1.bf16.msra.mxu0 %v323
        %343 = vmatprep.subr.bf16.mxu0 0
        %344 = vmatpush1.bf16.msra.mxu0 %v324
        %345 = vmatprep.subr.bf16.mxu0 0
        %346 = vmatpush1.bf16.msra.mxu0 %v325
        %347 = vmatprep.subr.bf16.mxu0 0
        %348 = vmatpush1.bf16.msra.mxu0 %v326
        %349 = vmatprep.subr.bf16.mxu0 0
        %350 = vmatpush1.bf16.msra.mxu0 %v327
        %351 = vmatprep.subr.bf16.mxu0 0
        %352 = vmatpush1.bf16.msra.mxu0 %v328
        %353 = vmatprep.subr.bf16.mxu0 0
        %354 = vmatpush1.bf16.msra.mxu0 0
        %355 = vmatprep.subr.bf16.mxu0 0
        %356 = vmatpush1.bf16.msra.mxu0 0
        %357 = vmatprep.subr.bf16.mxu0 0
        %358 = vmatpush1.bf16.msra.mxu0 0
        %359 = vmatprep.subr.bf16.mxu0 0
        %360 = vmatpush1.bf16.msra.mxu0 0
        %361 = vmatprep.subr.bf16.mxu0 0
        %362 = vmatpush1.bf16.msra.mxu0 0
        %363 = vmatprep.subr.bf16.mxu0 0
        %364 = vmatpush1.bf16.msra.mxu0 0
        %365 = vmatprep.subr.bf16.mxu0 0
        %366 = vmatpush1.bf16.msra.mxu0 0
        %367 = vmatprep.subr.bf16.mxu0 0
        %368 = vmatpush1.bf16.msra.mxu0 0
        %369 = vmatprep.mubr.bf16.mxu0 0
        %370 = vmatmul.mubr.bf16.gmra.mrb[0].mxu0 %v281
        %v371 = vpop.f32.mrb[0].mxu0
        %v372 = vadd.f32 %v287, %v371
        %v373 = vpop.f32.mrb[0].mxu0
        %v374 = vpop.f32.mrb[0].mxu0
        %v375 = vadd.f32 %v287, %v374
        %v376 = vpop.f32.mrb[0].mxu0
        %377 = vmatprep.mubr.bf16.mxu0 0
        %378 = vmatmul.mubr.bf16.gmra.mrb[0].mxu0 %v282
        %v379 = vpop.f32.mrb[0].mxu0
        %v380 = vadd.f32 %v287, %v379
        %v381 = vpop.f32.mrb[0].mxu0
        %v382 = vpop.f32.mrb[0].mxu0
        %v383 = vadd.f32 %v287, %v382
        %v384 = vpop.f32.mrb[0].mxu0
        %385 = vdwg.mxu0
        %v386 = vsel %vm50, %v372, 0.0
        %387 = vadd.xlane.f32.xlu0 %v386
        %v388 = vpop.xlane.xlu0 %387
        %v389 = vsel %vm50, %v375, 0.0
        %390 = vadd.xlane.f32.xlu0 %v389
        %v391 = vpop.xlane.xlu0 %390
        %v392 = vsel %vm50, %v380, 0.0
        %393 = vadd.xlane.f32.xlu0 %v392
        %v394 = vpop.xlane.xlu0 %393
        %v395 = vsel %vm50, %v383, 0.0
        %396 = vadd.xlane.f32.xlu0 %v395
        %v397 = vpop.xlane.xlu0 %396
        %v398 = vrcp.pop 32.0
        %v399 = vmul.f32 %v388, %v398
        %v400 = vmul.f32 %v391, %v398
        %v401 = vmul.f32 %v394, %v398
        %v402 = vmul.f32 %v397, %v398
        %v403 = vsub.f32 %v372, %v399
        %v404 = vsub.f32 %v375, %v400
        %v405 = vsub.f32 %v380, %v401
        %v406 = vsub.f32 %v383, %v402
        %v407 = vmul.f32 %v403, %v403
        %v408 = vmul.f32 %v404, %v404
        %v409 = vmul.f32 %v405, %v405
        %v410 = vmul.f32 %v406, %v406
        %v411 = vsel %vm50, %v407, 0.0
        %412 = vadd.xlane.f32.xlu0 %v411
        %v413 = vpop.xlane.xlu0 %412
        %v414 = vsel %vm50, %v408, 0.0
        %415 = vadd.xlane.f32.xlu0 %v414
        %v416 = vpop.xlane.xlu0 %415
        %v417 = vsel %vm50, %v409, 0.0
        %418 = vadd.xlane.f32.xlu0 %v417
        %v419 = vpop.xlane.xlu0 %418
        %v420 = vsel %vm50, %v410, 0.0
        %421 = vadd.xlane.f32.xlu0 %v420
        %v422 = vpop.xlane.xlu0 %421
        %v423 = vmul.f32 %v413, %v398
        %v424 = vmul.f32 %v416, %v398
        %v425 = vmul.f32 %v419, %v398
        %v426 = vmul.f32 %v422, %v398
        %v427 = vadd.f32 %v423, 1e-12
        %v428 = vadd.f32 %v424, 1e-12
        %v429 = vadd.f32 %v425, 1e-12
        %v430 = vadd.f32 %v426, 1e-12
        %v431 = vrsqrt.pop %v427
        %v432 = vrsqrt.pop %v428
        %v433 = vrsqrt.pop %v429
        %v434 = vrsqrt.pop %v430
        %v435 = vmul.f32 %v403, %v431
        %v436 = vmul.f32 %v404, %v432
        %v437 = vmul.f32 %v405, %v433
        %v438 = vmul.f32 %v406, %v434
        %v440 = vlaneseq
        %v441 = vshrl.u32 %v440, 7
        %v442 = vsub.s32 0, %v441
        %v443 = vrot.slane %v98, %v442
        %v445 = vmul.f32 %v435, %v443
        %v446 = vmul.f32 %v436, %v443
        %v447 = vmul.f32 %v437, %v443
        %v448 = vmul.f32 %v438, %v443
        %v450 = vlaneseq
        %v451 = vshrl.u32 %v450, 7
        %v452 = vsub.s32 0, %v451
        %v453 = vrot.slane %v99, %v452
        %v455 = vadd.f32 %v445, %v453
        %v456 = vadd.f32 %v446, %v453
        %v457 = vadd.f32 %v447, %v453
        %v458 = vadd.f32 %v448, %v453
        %v459 = vpack.c.bf16 %v456, %v455
        %v460 = vpack.c.bf16 %v458, %v457
        %v465 = vunpack.c.l.b16 %v100
        %v466 = vunpack.c.l.b16 %v101
        %v467 = vunpack.c.l.b16 %v102
        %v468 = vunpack.c.l.b16 %v103
        %v469 = vpack.c.b16 %v466, %v465
        %v470 = vpack.c.b16 %v468, %v467
        %v474 = vsel %vm50, %v459, 0
        %v477 = vsel %vm50, %v460, 0
        %479 = vmatprep.subr.bf16.mxu0 0
        %480 = vmatpush1.bf16.msra.mxu0 %v469
        %481 = vmatprep.subr.bf16.mxu0 0
        %482 = vmatpush1.bf16.msra.mxu0 %v470
        %483 = vmatprep.subr.bf16.mxu0 0
        %484 = vmatpush1.bf16.msra.mxu0 0
        %485 = vmatprep.subr.bf16.mxu0 0
        %486 = vmatpush1.bf16.msra.mxu0 0
        %487 = vmatprep.subr.bf16.mxu0 0
        %488 = vmatpush1.bf16.msra.mxu0 0
        %489 = vmatprep.subr.bf16.mxu0 0
        %490 = vmatpush1.bf16.msra.mxu0 0
        %491 = vmatprep.subr.bf16.mxu0 0
        %492 = vmatpush1.bf16.msra.mxu0 0
        %493 = vmatprep.subr.bf16.mxu0 0
        %494 = vmatpush1.bf16.msra.mxu0 0
        %495 = vmatprep.subr.bf16.mxu0 0
        %496 = vmatpush1.bf16.msra.mxu0 0
        %497 = vmatprep.subr.bf16.mxu0 0
        %498 = vmatpush1.bf16.msra.mxu0 0
        %499 = vmatprep.subr.bf16.mxu0 0
        %500 = vmatpush1.bf16.msra.mxu0 0
        %501 = vmatprep.subr.bf16.mxu0 0
        %502 = vmatpush1.bf16.msra.mxu0 0
        %503 = vmatprep.subr.bf16.mxu0 0
        %504 = vmatpush1.bf16.msra.mxu0 0
        %505 = vmatprep.subr.bf16.mxu0 0
        %506 = vmatpush1.bf16.msra.mxu0 0
        %507 = vmatprep.subr.bf16.mxu0 0
        %508 = vmatpush1.bf16.msra.mxu0 0
        %509 = vmatprep.subr.bf16.mxu0 0
        %510 = vmatpush1.bf16.msra.mxu0 0
        %511 = vmatprep.mubr.bf16.mxu0 0
        %512 = vmatmul.mubr.bf16.gmra.mrb[0].mxu0 %v474
        %v513 = vpop.f32.mrb[0].mxu0
        %v514 = vadd.f32 0.0, %v513
        %v515 = vpop.f32.mrb[0].mxu0
        %v516 = vpop.f32.mrb[0].mxu0
        %v517 = vadd.f32 0.0, %v516
        %v518 = vpop.f32.mrb[0].mxu0
        %519 = vmatprep.mubr.bf16.mxu0 0
        %520 = vmatmul.mubr.bf16.gmra.mrb[0].mxu0 %v477
        %v521 = vpop.f32.mrb[0].mxu0
        %v522 = vadd.f32 0.0, %v521
        %v523 = vpop.f32.mrb[0].mxu0
        %v524 = vpop.f32.mrb[0].mxu0
        %v525 = vadd.f32 0.0, %v524
        %v526 = vpop.f32.mrb[0].mxu0
        %527 = vdwg.mxu0
        %v528 = vadd.f32 %v180, %v514
        %v529 = vadd.f32 %v184, %v517
        %v530 = vadd.f32 %v190, %v522
        %v531 = vadd.f32 %v194, %v525
        %v532 = vxor.u32 %v528, 2147483648
        %v533 = vxor.u32 %v529, 2147483648
        %v534 = vxor.u32 %v530, 2147483648
        %v535 = vxor.u32 %v531, 2147483648
        %v536 = vmul.f32 %v532, 1.442695
        %v537 = vpow.pop %v536
        %v538 = vmul.f32 %v533, 1.442695
        %v539 = vpow.pop %v538
        %v540 = vmul.f32 %v534, 1.442695
        %v541 = vpow.pop %v540
        %v542 = vmul.f32 %v535, 1.442695
        %v543 = vpow.pop %v542
        %v544 = vadd.f32 %v537, 1.0
        %v545 = vadd.f32 %v539, 1.0
        %v546 = vadd.f32 %v541, 1.0
        %v547 = vadd.f32 %v543, 1.0
        %v548 = vrcp.pop %v544
        %v549 = vmul.f32 1.0, %v548
        %v550 = vrcp.pop %v545
        %v551 = vmul.f32 1.0, %v550
        %v552 = vrcp.pop %v546
        %v553 = vmul.f32 1.0, %v552
        %v554 = vrcp.pop %v547
        %v555 = vmul.f32 1.0, %v554
        %v556 = vsub.f32 %v455, %v70
        %v557 = vsub.f32 %v456, %v71
        %v558 = vsub.f32 %v457, %v72
        %v559 = vsub.f32 %v458, %v73
        %v560 = vmul.f32 %v549, %v556
        %v561 = vmul.f32 %v551, %v557
        %v562 = vmul.f32 %v553, %v558
        %v563 = vmul.f32 %v555, %v559
        %v564 = vadd.f32 %v70, %v560
        %v565 = vadd.f32 %v71, %v561
        %v566 = vadd.f32 %v72, %v562
        %v567 = vadd.f32 %v73, %v563
        %v568 = vld [vmem:[%s1] sm:$0xff]
        %v569 = vld [vmem:[%s1 + $0x8] sm:$0xff]
        %v570 = vld [vmem:[%s1 + $0x10] sm:$0xff]
        %v571 = vld [vmem:[%s1 + $0x18] sm:$0xff]
        %573 = vset.pattern.permute.xlu0 0
        %574 = vperm.xlu0 %573, %v568
        %v575 = vpop.permute.xlu0 %574
        %578 = vset.pattern.permute.xlu0 0
        %579 = vperm.xlu0 %578, %v569
        %v580 = vpop.permute.xlu0 %579
        %583 = vset.pattern.permute.xlu0 0
        %584 = vperm.xlu0 %583, %v570
        %v585 = vpop.permute.xlu0 %584
        %588 = vset.pattern.permute.xlu0 0
        %589 = vperm.xlu0 %588, %v571
        %v590 = vpop.permute.xlu0 %589
        %v592 = vmul.f32 %v564, %v575
        %v593 = vmul.f32 %v565, %v580
        %v594 = vmul.f32 %v566, %v585
        %v595 = vmul.f32 %v567, %v590
        %596 = vst.msk [vmem:[#allocation2] sm:$0xff] %vm50, %v592
        %597 = vst.msk [vmem:[#allocation2 + $0x8] sm:$0xff] %vm50, %v593
        %598 = vst.msk [vmem:[#allocation2 + $0x10] sm:$0xff] %vm50, %v594
        %599 = vst.msk [vmem:[#allocation2 + $0x18] sm:$0xff] %vm50, %v595
        %s600 = sld [smem:[#allocation3 + $0x1]]
        %s601 = sadd.s32 %s600, 1
        %602 = sst [smem:[%s57]] %s601
        %v603 = vsub.f32 %v592, %v70
        %v604 = vsub.f32 %v593, %v71
        %v605 = vsub.f32 %v594, %v72
        %v606 = vsub.f32 %v595, %v73
        %v607 = vld [vmem:[%s2] sm:$0xff]
        %v608 = vmul.f32 %v603, %v603
        %v609 = vmul.f32 %v604, %v604
        %v610 = vmul.f32 %v605, %v605
        %v611 = vmul.f32 %v606, %v606
        %v613 = vsel %vm50, %v607, 0
        %615 = vmatprep.subr.mxu0 0.0
        %616 = vmatpush1.msra.mxu0 %v608
        %617 = vmatprep.subr.mxu0 0.0
        %618 = vmatpush1.msra.mxu0 %v609
        %619 = vmatprep.subr.mxu0 0.0
        %620 = vmatpush1.msra.mxu0 %v610
        %621 = vmatprep.subr.mxu0 0.0
        %622 = vmatpush1.msra.mxu0 %v611
        %623 = vmatprep.subr.mxu0 0.0
        %624 = vmatpush1.msra.mxu0 0.0
        %625 = vmatprep.subr.mxu0 0.0
        %626 = vmatpush1.msra.mxu0 0.0
        %627 = vmatprep.subr.mxu0 0.0
        %628 = vmatpush1.msra.mxu0 0.0
        %629 = vmatprep.subr.mxu0 0.0
        %630 = vmatpush1.msra.mxu0 0.0
        %631 = vmatprep.subr.mxu0 0.0
        %632 = vmatpush1.msra.mxu0 0.0
        %633 = vmatprep.subr.mxu0 0.0
        %634 = vmatpush1.msra.mxu0 0.0
        %635 = vmatprep.subr.mxu0 0.0
        %636 = vmatpush1.msra.mxu0 0.0
        %637 = vmatprep.subr.mxu0 0.0
        %638 = vmatpush1.msra.mxu0 0.0
        %639 = vmatprep.subr.mxu0 0.0
        %640 = vmatpush1.msra.mxu0 0.0
        %641 = vmatprep.subr.mxu0 0.0
        %642 = vmatpush1.msra.mxu0 0.0
        %643 = vmatprep.subr.mxu0 0.0
        %644 = vmatpush1.msra.mxu0 0.0
        %645 = vmatprep.subr.mxu0 0.0
        %646 = vmatpush1.msra.mxu0 0.0
        %647 = vmatprep.subr.mxu0 0.0
        %648 = vmatpush1.msra.mxu0 0.0
        %649 = vmatprep.subr.mxu0 0.0
        %650 = vmatpush1.msra.mxu0 0.0
        %651 = vmatprep.subr.mxu0 0.0
        %652 = vmatpush1.msra.mxu0 0.0
        %653 = vmatprep.subr.mxu0 0.0
        %654 = vmatpush1.msra.mxu0 0.0
        %655 = vmatprep.subr.mxu0 0.0
        %656 = vmatpush1.msra.mxu0 0.0
        %657 = vmatprep.subr.mxu0 0.0
        %658 = vmatpush1.msra.mxu0 0.0
        %659 = vmatprep.subr.mxu0 0.0
        %660 = vmatpush1.msra.mxu0 0.0
        %661 = vmatprep.subr.mxu0 0.0
        %662 = vmatpush1.msra.mxu0 0.0
        %663 = vmatprep.subr.mxu0 0.0
        %664 = vmatpush1.msra.mxu0 0.0
        %665 = vmatprep.subr.mxu0 0.0
        %666 = vmatpush1.msra.mxu0 0.0
        %667 = vmatprep.subr.mxu0 0.0
        %668 = vmatpush1.msra.mxu0 0.0
        %669 = vmatprep.subr.mxu0 0.0
        %670 = vmatpush1.msra.mxu0 0.0
        %671 = vmatprep.subr.mxu0 0.0
        %672 = vmatpush1.msra.mxu0 0.0
        %673 = vmatprep.subr.mxu0 0.0
        %674 = vmatpush1.msra.mxu0 0.0
        %675 = vmatprep.subr.mxu0 0.0
        %676 = vmatpush1.msra.mxu0 0.0
        %677 = vmatprep.subr.mxu0 0.0
        %678 = vmatpush1.msra.mxu0 0.0
        %679 = vmatprep.mubr.f32.mxu0 0.0
        %680 = vmatmul.mubr.f32.gmra.mrb[0].mxu0 %v613
        %v681 = vpop.f32.mrb[0].mxu0
        %v682 = vadd.f32 0.0, %v681
        %v683 = vpop.f32.mrb[0].mxu0
        %684 = vdwg.mxu0
        %v685 = vsel %vm50, %v682, 0.0
        %686 = vadd.xlane.f32.xlu0 %v685
        %v687 = vpop.xlane.xlu0 %686
        %v688 = vrot.slane %v687, 4
        %v689 = vmax.f32 %v687, %v688
        %v690 = vrot.slane %v689, 2
        %v691 = vmax.f32 %v689, %v690
        %v692 = vrot.slane %v691, 1
        %v693 = vmax.f32 %v691, %v692
        %s694 = vtos %v693
        %p695 = scmp.ge.s32.totalorder %s60, 0
        %p696 = scmp.lt.f32.partialorder %s694, 0.01
        %p697 = pnand %p695, %p696
        %p698 = pneg %p697
        %s699 = sld [smem:[#allocation3]]
        %s700 = scalar_select %p698, 1, %s699
        %701 = sst [smem:[%s55]] %s700
      $region60: #{tpu_custom_call.1} parent=53 // pred_fallthru
        _
    $region54: #{tpu_custom_call.1} parent=1 // loop_footer
      %s64 = sadd.s32 1, %s60
    $region55: #{tpu_custom_call.1} parent=1 // loop_footer_branch
      %59 = sbr.rel target = $region51
    $region56: #{tpu_custom_call.1} parent=1 // loop_exit
      _
    %v702 = vld [vmem:[#allocation2] sm:$0xff]
    %v703 = vld [vmem:[#allocation2 + $0x8] sm:$0xff]
    %v704 = vld [vmem:[#allocation2 + $0x10] sm:$0xff]
    %v705 = vld [vmem:[#allocation2 + $0x18] sm:$0xff]
    %706 = vst.msk [vmem:[#allocation4] sm:$0xff] %vm50, %v702
    %707 = vst.msk [vmem:[#allocation4 + $0x8] sm:$0xff] %vm50, %v703
    %708 = vst.msk [vmem:[#allocation4 + $0x10] sm:$0xff] %vm50, %v704
    %709 = vst.msk [vmem:[#allocation4 + $0x18] sm:$0xff] %vm50, %v705
    %s710 = sld [smem:[#allocation3 + $0x1]]
    %v711 = vstv %s710
    %vm712 = vcmask 0
    %713 = vst.msk [vmem:[#allocation6] sm:$0x1] %vm712, %v711
    // Predicated region
    $region61: #{tpu_custom_call.1} parent=1 // pred_check
      _
    $region62: #{tpu_custom_call.1} parent=1 // pred_check_branch
      %715 = sbr.rel (0) target = $region64
    $region63: #{tpu_custom_call.1} parent=1 // pred_region
      %s717 = ssub.s32 512, 512
      %718 = vsyncadd [#allocation5], %s717
      %s719 = sshll.u32 [#allocation4], 4
      %s720 = int_to_ptr.vmem [resolvable:$true] %s719
      %725 = dma.vmem_to_hbm [thread:$0]  %s720, 512, %s12, [#allocation5], 128, 128, 8
    $region64: #{tpu_custom_call.1} parent=1 // pred_fallthru
      _
    // Predicated region
    $region65: #{tpu_custom_call.1} parent=1 // pred_check
      _
    $region66: #{tpu_custom_call.1} parent=1 // pred_check_branch
      %727 = sbr.rel (0) target = $region68
    $region67: #{tpu_custom_call.1} parent=1 // pred_region
      %s729 = ssub.s32 16, 16
      %730 = vsyncadd [#allocation7], %s729
      %s732 = sshll.u32 [#allocation6], 4
      %s733 = int_to_ptr.vmem [resolvable:$true] %s732
      %735 = dma.vmem_to_hbm [thread:$0]  %s733, 16, %s13, [#allocation7]
    $region68: #{tpu_custom_call.1} parent=1 // pred_fallthru
      _
    // Predicated region
    $region69: #{tpu_custom_call.1} parent=1 // pred_check
      _
    $region70: #{tpu_custom_call.1} parent=1 // pred_check_branch
      %737 = sbr.rel (0) target = $region72
    $region71: #{tpu_custom_call.1} parent=1 // pred_region
      %738 = dma.done [#allocation5], 512
    $region72: #{tpu_custom_call.1} parent=1 // pred_fallthru
      _
    // Predicated region
    $region73: #{tpu_custom_call.1} parent=1 // pred_check
      _
    $region74: #{tpu_custom_call.1} parent=1 // pred_check_branch
      %740 = sbr.rel (0) target = $region76
    $region75: #{tpu_custom_call.1} parent=1 // pred_region
      %741 = dma.done [#allocation7], 16
    $region76: #{tpu_custom_call.1} parent=1 // pred_fallthru
      _
    %742 = vsyncpa [#allocation5], 1
    %743 = vsyncpa [#allocation7], 1

</llo_original>
